<compile_context>
chip_gen: v7x
topology: tpu7x:2x2x1
jax: 0.10.0
libtpu: 0.0.40
codegen_flags: <defaults>
</compile_context>

<pallas_src>
import jax
import jax.numpy as jnp
import numpy as np
from jax.experimental import pallas as pl
from jax.experimental.pallas import tpu as pltpu

_LANE = 128                        # vreg lane width
_SUB = 8                           # vreg sublane count
_TARGET_X_TILE_BYTES = 2 << 20     # ~2 MiB streamed input tile
_SINGLE_BUFFER_W_BYTES = 1 << 20   # single-buffer resident weight above this size


def _round_up(n, m):
    return ((n + m - 1) // m) * m


def _vmem_capacity_bytes():
    """Per-core VMEM capacity; conservative fallback if the query is unavailable."""
    try:
        return int(pltpu.get_tpu_info().vmem_capacity_bytes)
    except Exception:
        return 64 * 1024 * 1024  # v7x per-TensorCore VMEM (smallest of v5e/v6e/v7x)


def _tab_encoder_kernel(x_ref, wt_ref, b_ref, o_ref):
    """One batch tile of relu(x @ W^T + b).

    x_ref:  (TB, D)  streamed input tile (compute dtype)
    wt_ref: (D, D)   pre-transposed weight (in_features, out_features)
    b_ref:  (1, D)   bias row (f32)
    o_ref:  (TB, D)  output tile
    """
    acc = jnp.dot(x_ref[...], wt_ref[...], preferred_element_type=jnp.float32)
    acc = acc + b_ref[...]                       # broadcast (1, D) over rows
    o_ref[...] = jnp.maximum(acc, 0.0).astype(o_ref.dtype)


def tabular_encoder_earlyfusion(x, w, b, *, use_bf16_compute=False):
    """relu(x @ w.T + b): batch-streamed, weight-resident Pallas TPU kernel.

    x: [B, D], w: [D, D] (nn.Linear layout: out_features x in_features), b: [D].
    use_bf16_compute: cast x/W to bf16 (f32 accumulate / bias / ReLU kept in f32).
    """
    B, D = x.shape
    assert w.shape == (D, D) and b.shape == (D,)
    out_dtype = x.dtype

    compute_dtype = jnp.bfloat16 if use_bf16_compute else x.dtype
    itemsize = jnp.dtype(compute_dtype).itemsize
    out_itemsize = jnp.dtype(out_dtype).itemsize

    # One-time transpose (and optional cast) of the PyTorch-layout weight so the
    # resident MXU operand is already (K, N). Costs O(D^2) HBM once vs O(B*D)
    # streamed by the kernel.
    xc = x.astype(compute_dtype)
    wt = w.T.astype(compute_dtype)
    b2 = b.reshape(1, D).astype(jnp.float32)

    # --- batch tile size -----------------------------------------------------
    vmem_cap = _vmem_capacity_bytes()
    work_budget = min(int(vmem_cap * 0.6), 48 * 1024 * 1024)

    row_bytes = D * itemsize
    tb = max(512, _TARGET_X_TILE_BYTES // max(row_bytes, 1))
    tb = _round_up(tb, 256)
    # v7x megacore: keep >=2 grid steps on the "parallel" batch axis when B is
    # large enough so both TensorCores get work (neutral on v5e/v6e).
    tb = min(tb, max(256, _round_up(-(-B // 2), 256)))
    # Never larger than the sublane-rounded batch.
    tb = min(tb, _round_up(B, _SUB))
    # Cap by VMEM: resident weight + bias + double-buffered x and o tiles.
    resident_bytes = D * D * itemsize + D * 4
    stream_bytes_per_row = 2 * D * itemsize + 2 * D * out_itemsize
    max_tb_vmem = (work_budget - resident_bytes) // max(stream_bytes_per_row, 1)
    tb = min(tb, max(_SUB, (max_tb_vmem // _SUB) * _SUB))
    tb = max(_SUB, (tb // _SUB) * _SUB)

    grid = (pl.cdiv(B, tb),)

    # Weight/bias are grid-invariant (constant index map -> DMA'd exactly once).
    # Single-buffer them when the resident weight is large enough to matter so
    # the pipeline doesn't waste a second D*D*itemsize VMEM buffer on a block
    # that never changes (the small-D demo shapes below keep the default).
    resident_kwargs = {}
    if D * D * itemsize >= _SINGLE_BUFFER_W_BYTES:
        resident_kwargs = dict(pipeline_mode=pl.Buffered(1))
    w_spec = pl.BlockSpec((D, D), lambda i: (0, 0), **resident_kwargs)
    b_spec = pl.BlockSpec((1, D), lambda i: (0, 0), **resident_kwargs)

    # Generation-aware VMEM limit from the actual buffer sizes (+ margin).
    w_buffers = 1 if resident_kwargs else 2
    need = (w_buffers * resident_bytes
            + tb * stream_bytes_per_row
            + 2 * 1024 * 1024)
    vmem_limit = int(min(max(need + need // 4, 16 * 1024 * 1024),
                         int(vmem_cap * 0.9)))

    out = pl.pallas_call(
        _tab_encoder_kernel,
        out_shape=jax.ShapeDtypeStruct((B, D), out_dtype),
        grid_spec=pltpu.PrefetchScalarGridSpec(
            num_scalar_prefetch=0,
            grid=grid,
            in_specs=[
                # x streams per batch tile (software-pipelined / double-buffered);
                # last block dim == full D so ragged lanes use masked stores.
                pl.BlockSpec((tb, D), lambda i: (i, 0)),
                w_spec,
                b_spec,
            ],
            out_specs=pl.BlockSpec((tb, D), lambda i: (i, 0)),
        ),
        compiler_params=pltpu.CompilerParams(
            dimension_semantics=("parallel",),
            vmem_limit_bytes=vmem_limit,
        ),
    )(xc, wt, b2)

    return out


if __name__ == "__main__":
    key = jax.random.PRNGKey(0)

    def make_inputs(B, D, salt):
        # Small-integer-valued f32 inputs: exactly representable in bf16 and
        # exactly accumulated in f32, so the reference comparison is independent
        # of MXU precision mode while still exercising tiling, masked edges,
        # the weight transpose, bias add, and ReLU.
        kx, kw, kb = jax.random.split(jax.random.fold_in(key, salt), 3)
        x = jax.random.randint(kx, (B, D), -3, 4).astype(jnp.float32)
        w = jax.random.randint(kw, (D, D), -3, 4).astype(jnp.float32)
        b = jax.random.randint(kb, (D,), -3, 4).astype(jnp.float32)
        return x, w, b

    def reference(x, w, b):
        xf = np.asarray(x, np.float64)
        wf = np.asarray(w, np.float64)
        bf = np.asarray(b, np.float64)
        return np.maximum(xf @ wf.T + bf, 0.0)

    # Small production-like shape (batch=8, input_dim=32).
    x, w, b = make_inputs(8, 32, 0)
    out = jax.block_until_ready(tabular_encoder_earlyfusion(x, w, b))
    assert out.shape == (8, 32)
    np.testing.assert_allclose(np.asarray(out, np.float64), reference(x, w, b),
                               rtol=1e-5, atol=1e-5)

    # Ragged shape: D=200 (not a lane multiple) and B=1000 (partial last batch tile).
    x, w, b = make_inputs(1000, 200, 1)
    ref = reference(x, w, b)
    out = jax.block_until_ready(tabular_encoder_earlyfusion(x, w, b))
    assert out.shape == (1000, 200)
    np.testing.assert_allclose(np.asarray(out, np.float64), ref, rtol=1e-5, atol=1e-5)

    # Optional bf16 compute path (exact for these integer-valued inputs).
    out_bf16 = jax.block_until_ready(
        tabular_encoder_earlyfusion(x, w, b, use_bf16_compute=True))
    assert out_bf16.shape == (1000, 200)
    np.testing.assert_allclose(np.asarray(out_bf16, np.float64), ref,
                               rtol=1e-5, atol=1e-5)

    print("KERNEL_OK")
</pallas_src>

<mosaic_0001>
module attributes {stable_mosaic.version = 11 : i64} {
  func.func @_tab_encoder_kernel(%arg0: i32, %arg1: memref<8x32xf32, #tpu.memory_space<vmem>>, %arg2: memref<32x32xf32, #tpu.memory_space<vmem>>, %arg3: memref<1x32xf32, #tpu.memory_space<vmem>>, %arg4: memref<8x32xf32, #tpu.memory_space<vmem>>) attributes {dimension_semantics = [#tpu.dimension_semantics<parallel>], iteration_bounds = array<i64: 1>, scalar_prefetch = 0 : i64, scratch_operands = 0 : i64, tpu.core_type = #tpu.core_type<tc>, window_params = [{transform_indices = @transform_0, window_bounds = array<i64: 8, 32>}, {pipeline_mode = #tpu.pipeline_mode<synchronous>, transform_indices = @transform_1, window_bounds = array<i64: 32, 32>}, {pipeline_mode = #tpu.pipeline_mode<synchronous>, transform_indices = @transform_2, window_bounds = array<i64: 1, 32>}, {transform_indices = @transform_3, window_bounds = array<i64: 8, 32>}]} {
    %c0 = arith.constant 0 : index
    %c0_0 = arith.constant 0 : index
    %0 = vector.load %arg1[%c0, %c0_0] : memref<8x32xf32, #tpu.memory_space<vmem>>, vector<8x32xf32>
    %c0_1 = arith.constant 0 : index
    %c0_2 = arith.constant 0 : index
    %1 = vector.load %arg2[%c0_1, %c0_2] : memref<32x32xf32, #tpu.memory_space<vmem>>, vector<32x32xf32>
    %cst = arith.constant dense<0.000000e+00> : vector<8x32xf32>
    %2 = tpu.matmul %0, %1, %cst {dimension_numbers = #tpu.dot_dimension_numbers<[1], [0], [0], [1], [0, 0, 1, 1], [], []>} : vector<8x32xf32>, vector<32x32xf32>, vector<8x32xf32> -> vector<8x32xf32>
    %c0_3 = arith.constant 0 : index
    %c0_4 = arith.constant 0 : index
    %3 = vector.load %arg3[%c0_3, %c0_4] : memref<1x32xf32, #tpu.memory_space<vmem>>, vector<1x32xf32>
    %4 = vector.broadcast %3 : vector<1x32xf32> to vector<8x32xf32>
    %5 = arith.addf %2, %4 : vector<8x32xf32>
    %cst_5 = arith.constant 0.000000e+00 : f32
    %6 = vector.broadcast %cst_5 : f32 to vector<8x32xf32>
    %7 = arith.maximumf %5, %6 : vector<8x32xf32>
    %c0_6 = arith.constant 0 : index
    %c0_7 = arith.constant 0 : index
    %8 = vector.load %arg4[%c0_6, %c0_7] : memref<8x32xf32, #tpu.memory_space<vmem>>, vector<8x32xf32>
    tpu.vector_store %arg4[%c0_6, %c0_7], %7 {strides = array<i32>} : memref<8x32xf32, #tpu.memory_space<vmem>>, vector<8x32xf32>,
    return
  }
  func.func @transform_0(%arg0: i32) -> (i32, i32) {
    %c0_i32 = arith.constant 0 : i32
    %c0_i32_0 = arith.constant 0 : i32
    return %arg0, %c0_i32 : i32, i32
  }
  func.func @transform_1(%arg0: i32) -> (i32, i32) {
    %c0_i32 = arith.constant 0 : i32
    %c0_i32_0 = arith.constant 0 : i32
    %c0_i32_1 = arith.constant 0 : i32
    return %c0_i32, %c0_i32_0 : i32, i32
  }
  func.func @transform_2(%arg0: i32) -> (i32, i32) {
    %c0_i32 = arith.constant 0 : i32
    %c0_i32_0 = arith.constant 0 : i32
    %c0_i32_1 = arith.constant 0 : i32
    return %c0_i32, %c0_i32_0 : i32, i32
  }
  func.func @transform_3(%arg0: i32) -> (i32, i32) {
    %c0_i32 = arith.constant 0 : i32
    %c0_i32_0 = arith.constant 0 : i32
    return %arg0, %c0_i32 : i32, i32
  }
}

</mosaic_0001>

<llo_original>
// kernel: tpu_custom_call.1
$region0: #{tpu_custom_call.1}
  #allocation0 [shape = 'u32[]', space=smem, size = 0x4, offset = 0x4, fixed_abs, tag = 'smem constant byte address 0x4 - core index']
  #allocation1 [shape = 'u32[144,128]{1,0:T(1,128)}', space=vmem, size = 0x12000, scoped, tag = 'internal scratch']
  %s0 = inlined_call_operand.hbm [shape: f32[8,32], index: 0, kind: input, shape index: {}]
  %s1 = inlined_call_operand.hbm [shape: f32[32,32], index: 1, kind: input, shape index: {}]
  %s2 = inlined_call_operand.vmem [shape: f32[1,32], index: 2, kind: input, shape index: {}]
  %s3 = inlined_call_operand.hbm [shape: f32[8,32], index: 3, kind: output, shape index: {}]
  %s4 = sld [smem:[#allocation0]]
  $region30: #{tpu_custom_call.1} parent=0
    _
  %s6 = ssub.s32 1, %s4
  %s7 = scalar_select 0, %s6, %s4
  $region1: #{tpu_custom_call.1} parent=0
    #allocation2 [shape = 'u8[4096]{0}', space=vmem, size = 0x1000, scoped, tag = 'input window, operand 0, single buffered']
    #allocation3 [shape = 's32[1]{0}', space=sflag, size = 0x4, scoped, tag = 'scoped memory for tpu_custom_call.1']
    #allocation4 [shape = 's32[1]{0}', space=sflag, size = 0x4, scoped, tag = 'scoped memory for tpu_custom_call.1']
    #allocation5 [shape = 'u8[16384]{0}', space=vmem, size = 0x4000, scoped, tag = 'input window, operand 1, single buffered']
    #allocation6 [shape = 's32[1]{0}', space=sflag, size = 0x4, scoped, tag = 'scoped memory for tpu_custom_call.1']
    #allocation7 [shape = 'u8[4096]{0}', space=vmem, size = 0x1000, scoped, tag = 'output window, operand 0, single buffered']
    %8 = vsyncpa [#allocation3], 0
    %9 = vsyncpa [#allocation6], 0
    %10 = vsyncpa [#allocation4], 0
    // Predicated region
    $region2: #{tpu_custom_call.1} parent=1 // pred_check
      _
    $region3: #{tpu_custom_call.1} parent=1 // pred_check_branch
      %12 = sbr.rel (0) target = $region5
    $region4: #{tpu_custom_call.1} parent=1 // pred_region
      %s14 = ssub.s32 128, 128
      %15 = vsyncadd [#allocation3], %s14
      %s17 = sshll.u32 [#allocation2], 4
      %s18 = int_to_ptr.vmem [resolvable:$true] %s17
      %20 = dma.hbm_to_vmem [thread:$0]  %s0, 128, %s18, [#allocation3]
    $region5: #{tpu_custom_call.1} parent=1 // pred_fallthru
      _
    // Predicated region
    $region6: #{tpu_custom_call.1} parent=1 // pred_check
      _
    $region7: #{tpu_custom_call.1} parent=1 // pred_check_branch
      %22 = sbr.rel (0) target = $region9
    $region8: #{tpu_custom_call.1} parent=1 // pred_region
      %s24 = ssub.s32 512, 512
      %25 = vsyncadd [#allocation6], %s24
      %s26 = sshll.u32 [#allocation5], 4
      %s27 = int_to_ptr.vmem [resolvable:$true] %s26
      %32 = dma.hbm_to_vmem [thread:$0]  %s1, 512, %s27, [#allocation6], 128, 128, 8
    $region9: #{tpu_custom_call.1} parent=1 // pred_fallthru
      _
    // Predicated region
    $region10: #{tpu_custom_call.1} parent=1 // pred_check
      _
    $region11: #{tpu_custom_call.1} parent=1 // pred_check_branch
      %34 = sbr.rel (0) target = $region13
    $region12: #{tpu_custom_call.1} parent=1 // pred_region
      _
    $region13: #{tpu_custom_call.1} parent=1 // pred_fallthru
      _
    // Predicated region
    $region14: #{tpu_custom_call.1} parent=1 // pred_check
      _
    $region15: #{tpu_custom_call.1} parent=1 // pred_check_branch
      %36 = sbr.rel (0) target = $region17
    $region16: #{tpu_custom_call.1} parent=1 // pred_region
      %37 = dma.done [#allocation3], 128
    $region17: #{tpu_custom_call.1} parent=1 // pred_fallthru
      _
    // Predicated region
    $region18: #{tpu_custom_call.1} parent=1 // pred_check
      _
    $region19: #{tpu_custom_call.1} parent=1 // pred_check_branch
      %39 = sbr.rel (0) target = $region21
    $region20: #{tpu_custom_call.1} parent=1 // pred_region
      %40 = dma.done [#allocation6], 512
    $region21: #{tpu_custom_call.1} parent=1 // pred_fallthru
      _
    %v41 = vld [vmem:[#allocation2] sm:$0xff]
    %v42 = vld [vmem:[#allocation5] sm:$0xff]
    %v43 = vld [vmem:[#allocation5 + $0x8] sm:$0xff]
    %v44 = vld [vmem:[#allocation5 + $0x10] sm:$0xff]
    %v45 = vld [vmem:[#allocation5 + $0x18] sm:$0xff]
    %v46 = vld [vmem:[%s2] sm:$0x1]
    %v48 = vlaneseq
    %v49 = vshrl.u32 %v48, 7
    %v50 = vsub.s32 0, %v49
    %v51 = vrot.slane %v46, %v50
    %vm53 = vcmask 261120
    %v55 = vsel %vm53, %v41, 0
    %57 = vmatprep.subr.mxu0 0.0
    %58 = vmatpush1.msra.mxu0 %v42
    %59 = vmatprep.subr.mxu0 0.0
    %60 = vmatpush1.msra.mxu0 %v43
    %61 = vmatprep.subr.mxu0 0.0
    %62 = vmatpush1.msra.mxu0 %v44
    %63 = vmatprep.subr.mxu0 0.0
    %64 = vmatpush1.msra.mxu0 %v45
    %65 = vmatprep.subr.mxu0 0.0
    %66 = vmatpush1.msra.mxu0 0.0
    %67 = vmatprep.subr.mxu0 0.0
    %68 = vmatpush1.msra.mxu0 0.0
    %69 = vmatprep.subr.mxu0 0.0
    %70 = vmatpush1.msra.mxu0 0.0
    %71 = vmatprep.subr.mxu0 0.0
    %72 = vmatpush1.msra.mxu0 0.0
    %73 = vmatprep.subr.mxu0 0.0
    %74 = vmatpush1.msra.mxu0 0.0
    %75 = vmatprep.subr.mxu0 0.0
    %76 = vmatpush1.msra.mxu0 0.0
    %77 = vmatprep.subr.mxu0 0.0
    %78 = vmatpush1.msra.mxu0 0.0
    %79 = vmatprep.subr.mxu0 0.0
    %80 = vmatpush1.msra.mxu0 0.0
    %81 = vmatprep.subr.mxu0 0.0
    %82 = vmatpush1.msra.mxu0 0.0
    %83 = vmatprep.subr.mxu0 0.0
    %84 = vmatpush1.msra.mxu0 0.0
    %85 = vmatprep.subr.mxu0 0.0
    %86 = vmatpush1.msra.mxu0 0.0
    %87 = vmatprep.subr.mxu0 0.0
    %88 = vmatpush1.msra.mxu0 0.0
    %89 = vmatprep.subr.mxu0 0.0
    %90 = vmatpush1.msra.mxu0 0.0
    %91 = vmatprep.subr.mxu0 0.0
    %92 = vmatpush1.msra.mxu0 0.0
    %93 = vmatprep.subr.mxu0 0.0
    %94 = vmatpush1.msra.mxu0 0.0
    %95 = vmatprep.subr.mxu0 0.0
    %96 = vmatpush1.msra.mxu0 0.0
    %97 = vmatprep.subr.mxu0 0.0
    %98 = vmatpush1.msra.mxu0 0.0
    %99 = vmatprep.subr.mxu0 0.0
    %100 = vmatpush1.msra.mxu0 0.0
    %101 = vmatprep.subr.mxu0 0.0
    %102 = vmatpush1.msra.mxu0 0.0
    %103 = vmatprep.subr.mxu0 0.0
    %104 = vmatpush1.msra.mxu0 0.0
    %105 = vmatprep.subr.mxu0 0.0
    %106 = vmatpush1.msra.mxu0 0.0
    %107 = vmatprep.subr.mxu0 0.0
    %108 = vmatpush1.msra.mxu0 0.0
    %109 = vmatprep.subr.mxu0 0.0
    %110 = vmatpush1.msra.mxu0 0.0
    %111 = vmatprep.subr.mxu0 0.0
    %112 = vmatpush1.msra.mxu0 0.0
    %113 = vmatprep.subr.mxu0 0.0
    %114 = vmatpush1.msra.mxu0 0.0
    %115 = vmatprep.subr.mxu0 0.0
    %116 = vmatpush1.msra.mxu0 0.0
    %117 = vmatprep.subr.mxu0 0.0
    %118 = vmatpush1.msra.mxu0 0.0
    %119 = vmatprep.subr.mxu0 0.0
    %120 = vmatpush1.msra.mxu0 0.0
    %121 = vmatprep.mubr.f32.mxu0 0.0
    %122 = vmatmul.mubr.f32.gmra.mrb[0].mxu0 %v55
    %v123 = vpop.f32.mrb[0].mxu0
    %v124 = vadd.f32 %v51, %v123
    %v125 = vpop.f32.mrb[0].mxu0
    %126 = vdwg.mxu0
    %v127 = vmax.f32 %v124, 0.0
    %128 = vst.msk [vmem:[#allocation7] sm:$0xff] %vm53, %v127
    // Predicated region
    $region22: #{tpu_custom_call.1} parent=1 // pred_check
      _
    $region23: #{tpu_custom_call.1} parent=1 // pred_check_branch
      %130 = sbr.rel (0) target = $region25
    $region24: #{tpu_custom_call.1} parent=1 // pred_region
      %s132 = ssub.s32 128, 128
      %133 = vsyncadd [#allocation4], %s132
      %s135 = sshll.u32 [#allocation7], 4
      %s136 = int_to_ptr.vmem [resolvable:$true] %s135
      %138 = dma.vmem_to_hbm [thread:$0]  %s136, 128, %s3, [#allocation4]
    $region25: #{tpu_custom_call.1} parent=1 // pred_fallthru
      _
    // Predicated region
    $region26: #{tpu_custom_call.1} parent=1 // pred_check
      _
    $region27: #{tpu_custom_call.1} parent=1 // pred_check_branch
      %140 = sbr.rel (0) target = $region29
    $region28: #{tpu_custom_call.1} parent=1 // pred_region
      %141 = dma.done [#allocation4], 128
    $region29: #{tpu_custom_call.1} parent=1 // pred_fallthru
      _
    %142 = vsyncpa [#allocation3], 1
    %143 = vsyncpa [#allocation6], 1
    %144 = vsyncpa [#allocation4], 1

</llo_original>
